<compile_context>
chip_gen: v5e
topology: v5e:2x2
jax: 0.10.0
libtpu: 0.0.40
codegen_flags: <defaults>
</compile_context>

<pallas_src>
import functools

import jax
import jax.numpy as jnp
from jax.experimental import pallas as pl
from jax.experimental.pallas import tpu as pltpu


def _spade_kernel(x_ref, seg_ref, w_seg_ref, b_seg_ref,
                  w_g_ref, b_g_ref, w_b_ref, b_b_ref, out_ref):
    """One (C, T) pixel slab: fused SPADE 1x1 convs + BN-folded modulation.

    x_ref    : (C, T)    input feature pixels (pixels on the lane axis)
    seg_ref  : (Cs, T)   nearest-resized seg pixels
    w_seg_ref: (M, Cs)   conv_seg weight (transposed)
    b_seg_ref: (M, 1)    conv_seg bias (column)
    w_g_ref  : (C, M)    BN-folded gamma weight:  (w_gamma * bn_scale)^T
    b_g_ref  : (C, 1)    BN-folded gamma bias:    (b_gamma + 1) * bn_scale
    w_b_ref  : (C, M)    BN-folded beta weight:   (w_beta + w_gamma*bn_shift)^T
    b_b_ref  : (C, 1)    BN-folded beta bias:     b_beta + (b_gamma+1)*bn_shift
    out_ref  : (C, T)    out = x * gamma' + beta'
    """
    hi = jax.lax.Precision.HIGHEST

    seg = seg_ref[...]
    if seg_ref.shape[0] == 1:
        # Cs == 1: conv_seg is an outer product -> VPU broadcast-multiply.
        feat = w_seg_ref[...] * seg + b_seg_ref[...]                  # (M, T)
    else:
        feat = jnp.dot(w_seg_ref[...], seg,
                       preferred_element_type=jnp.float32,
                       precision=hi) + b_seg_ref[...]
    feat = jnp.maximum(feat, 0.0)

    # Two separate dots (gamma / beta), each consumed immediately: halves the
    # largest live f32 intermediate (matters on v7x's 64 MiB VMEM); the extra
    # MXU pass is hidden under the HBM-bound pixel streams.
    gamma_s = jnp.dot(w_g_ref[...], feat,
                      preferred_element_type=jnp.float32,
                      precision=hi) + b_g_ref[...]                    # (C, T)
    x = x_ref[...]
    xg = x * gamma_s
    beta_s = jnp.dot(w_b_ref[...], feat,
                     preferred_element_type=jnp.float32,
                     precision=hi) + b_b_ref[...]                     # (C, T)

    out_ref[...] = (xg + beta_s).astype(out_ref.dtype)


def _round_up(v, m):
    return (v + m - 1) // m * m


def _ceil_div(a, b):
    return -(-a // b)


def _choose_tile_and_vmem(c, cs, m, hw, n, pixel_tile):
    """Static (Python-int) tile sizing: lane-dense, ~>=1 MiB x/out blocks,
    capped by a v7x-safe VMEM working-set budget."""
    hw_up = _round_up(hw, 128)

    # VMEM bytes per pixel column: double-buffered x/seg/out streams plus the
    # feat / gamma / beta f32 intermediates.
    bytes_per_pixel = 4 * (2 * (2 * c + cs) + m + 2 * c)

    if pixel_tile is None:
        # >= ~1 MiB per x/out block amortizes the ~0.35 us grid-step overhead
        # and gives long contiguous DMA bursts (>=85% of HBM roofline).
        tile = max(512, _round_up(_ceil_div(262144, max(c, 1)), 128))
    else:
        tile = _round_up(max(int(pixel_tile), 128), 128)

    # v7x has only 64 MiB physical VMEM -> keep the working set under ~40 MiB.
    budget = 40 * 1024 * 1024
    cap = max(128, (budget // bytes_per_pixel) // 128 * 128)
    tile = min(tile, cap, hw_up)

    # With a single image, make sure both TensorCores (v7x megacore / grid
    # sharding) get pixel blocks.
    if n == 1 and hw_up >= 256:
        tile = min(tile, max(128, _round_up(_ceil_div(hw, 2), 128)))
    tile = max(tile, 128)

    needed = bytes_per_pixel * tile + (1 << 20)        # + weights & slack
    vmem_limit = int(min(64 << 20, max(32 << 20, needed + needed // 2)))
    return tile, vmem_limit


def _nearest_resize_nchw(seg_map, out_h, out_w):
    """F.interpolate(mode='nearest') for NCHW input (plain-JAX glue)."""
    _, _, in_h, in_w = seg_map.shape
    idx_h = jnp.floor(jnp.arange(out_h) * (in_h / out_h)).astype(jnp.int32)
    idx_w = jnp.floor(jnp.arange(out_w) * (in_w / out_w)).astype(jnp.int32)
    return seg_map[:, :, idx_h, :][:, :, :, idx_w]


@functools.partial(jax.jit, static_argnames=("pixel_tile",))
def spade_norm_forward(x, seg_map, params, pixel_tile=None):
    """x: (N, C, H, W) float32; seg_map: (N, Cs, Hs, Ws) float32."""
    n, c, h, w = x.shape
    cs = seg_map.shape[1]
    m = params["w_seg"].shape[1]
    hw = h * w

    # --- glue: nearest-resize the (cheap, Cs-channel) seg map; keep NCHW ----
    rseg = _nearest_resize_nchw(seg_map, h, w)            # (N, Cs, H, W)
    x_flat = x.reshape(n, c, hw)                          # free view, no copy
    seg_flat = rseg.reshape(n, cs, hw)

    # --- tile sizing (static, HW-generation aware) ---------------------------
    tile, vmem_limit = _choose_tile_and_vmem(c, cs, m, hw, n, pixel_tile)
    grid = (n, _ceil_div(hw, tile))       # ragged tail blocks: no pad / slice

    # --- fold parameters (all exact, done once in the wrapper) ---------------
    eps = 1e-5
    inv_std = jax.lax.rsqrt(params["bn_running_var"] + eps)
    bn_scale = params["bn_weight"] * inv_std                           # s (C,)
    bn_shift = params["bn_bias"] - params["bn_running_mean"] * bn_scale  # t (C,)

    w_gamma = params["w_gamma"]                                        # (M, C)
    w_beta = params["w_beta"]                                          # (M, C)
    bg1 = params["b_gamma"] + 1.0                                      # (C,)

    w_seg_t = params["w_seg"].T                                        # (M, Cs)
    b_seg_col = params["b_seg"].reshape(m, 1)                          # (M, 1)
    w_g_t = (w_gamma * bn_scale[None, :]).T                            # (C, M)
    b_g_col = (bg1 * bn_scale).reshape(c, 1)                           # (C, 1)
    w_b_t = (w_beta + w_gamma * bn_shift[None, :]).T                   # (C, M)
    b_b_col = (params["b_beta"] + bg1 * bn_shift).reshape(c, 1)        # (C, 1)

    pix_map = lambda i, j: (i, 0, j)
    rep_map = lambda i, j: (0, 0)

    out_flat = pl.pallas_call(
        _spade_kernel,
        out_shape=jax.ShapeDtypeStruct((n, c, hw), x.dtype),
        grid=grid,
        in_specs=[
            pl.BlockSpec((None, c, tile), pix_map),    # x pixels
            pl.BlockSpec((None, cs, tile), pix_map),   # seg pixels
            pl.BlockSpec((m, cs), rep_map),            # w_seg^T
            pl.BlockSpec((m, 1), rep_map),             # b_seg (column)
            pl.BlockSpec((c, m), rep_map),             # BN-folded gamma weight
            pl.BlockSpec((c, 1), rep_map),             # BN-folded gamma bias
            pl.BlockSpec((c, m), rep_map),             # BN-folded beta weight
            pl.BlockSpec((c, 1), rep_map),             # BN-folded beta bias
        ],
        out_specs=pl.BlockSpec((None, c, tile), pix_map),
        compiler_params=pltpu.CompilerParams(
            dimension_semantics=("parallel", "parallel"),
            vmem_limit_bytes=vmem_limit),
    )(x_flat, seg_flat, w_seg_t, b_seg_col, w_g_t, b_g_col, w_b_t, b_b_col)

    return out_flat.reshape(n, c, h, w)


def make_params(key, num_channels, seg_channels=1, seg_mid_channels=32):
    """Deterministic parameter init (synthetic; shapes match the nn.Module)."""
    ks = jax.random.split(key, 10)
    f32 = jnp.float32
    return {
        # BatchNorm2d(num_channels), inference-mode stats
        "bn_weight": jax.random.normal(ks[0], (num_channels,), f32) * 0.1 + 1.0,
        "bn_bias": jax.random.normal(ks[1], (num_channels,), f32) * 0.1,
        "bn_running_mean": jax.random.normal(ks[2], (num_channels,), f32) * 0.1,
        "bn_running_var": jax.random.uniform(ks[3], (num_channels,), f32,
                                             0.5, 1.5),
        # Conv2d(seg_channels, seg_mid, 1) stored as (Cin, Cout) for matmul
        "w_seg": jax.random.normal(ks[4], (seg_channels, seg_mid_channels),
                                   f32) * 0.5,
        "b_seg": jax.random.normal(ks[5], (seg_mid_channels,), f32) * 0.1,
        # Conv2d(seg_mid, num_channels, 1)
        "w_gamma": jax.random.normal(ks[6], (seg_mid_channels, num_channels),
                                     f32) * 0.1,
        "b_gamma": jax.random.normal(ks[7], (num_channels,), f32) * 0.1,
        "w_beta": jax.random.normal(ks[8], (seg_mid_channels, num_channels),
                                    f32) * 0.1,
        "b_beta": jax.random.normal(ks[9], (num_channels,), f32) * 0.1,
    }


def _reference_forward(x, seg_map, params):
    """Pure-JAX reference of the same forward for a correctness check."""
    n, c, h, w = x.shape
    hi = jax.lax.Precision.HIGHEST
    eps = 1e-5
    inv_std = 1.0 / jnp.sqrt(params["bn_running_var"] + eps)
    x_bn = ((x - params["bn_running_mean"][None, :, None, None])
            * (params["bn_weight"] * inv_std)[None, :, None, None]
            + params["bn_bias"][None, :, None, None])
    resized = _nearest_resize_nchw(seg_map, h, w)
    seg_rows = jnp.transpose(resized, (0, 2, 3, 1)).reshape(-1, seg_map.shape[1])
    feat = jnp.maximum(
        jnp.dot(seg_rows, params["w_seg"], precision=hi) + params["b_seg"], 0.0)
    gamma = (jnp.dot(feat, params["w_gamma"], precision=hi) + params["b_gamma"]
             ).reshape(n, h, w, c).transpose(0, 3, 1, 2)
    beta = (jnp.dot(feat, params["w_beta"], precision=hi) + params["b_beta"]
            ).reshape(n, h, w, c).transpose(0, 3, 1, 2)
    return x_bn * (gamma + 1.0) + beta


if __name__ == "__main__":
    key = jax.random.PRNGKey(0)
    k_x, k_seg, k_p = jax.random.split(key, 3)

    N, C, H, W = 2, 4, 16, 16
    SEG_C, SEG_HW = 1, 8        # seg map at lower resolution -> nearest upsample

    x = jax.random.normal(k_x, (N, C, H, W), jnp.float32)
    seg_map = jax.random.uniform(k_seg, (N, SEG_C, SEG_HW, SEG_HW), jnp.float32)
    params = make_params(k_p, num_channels=C, seg_channels=SEG_C,
                         seg_mid_channels=32)

    out = spade_norm_forward(x, seg_map, params)
    out = jax.block_until_ready(out)

    ref = _reference_forward(x, seg_map, params)
    assert out.shape == (N, C, H, W)
    # BN fold and kernel dots are exact in f32 (HIGHEST precision); 5e-4 leaves
    # margin for accumulation-order differences while catching real bugs.
    assert jnp.max(jnp.abs(out - ref)) < 5e-4

    print("KERNEL_OK")
</pallas_src>

<mosaic_0001>
module attributes {stable_mosaic.version = 11 : i64} {
  func.func @_spade_kernel(%arg0: i32, %arg1: i32, %arg2: memref<1x4x256xf32, #tpu.memory_space<vmem>>, %arg3: memref<1x1x256xf32, #tpu.memory_space<vmem>>, %arg4: memref<32x1xf32, #tpu.memory_space<vmem>>, %arg5: memref<32x1xf32, #tpu.memory_space<vmem>>, %arg6: memref<4x32xf32, #tpu.memory_space<vmem>>, %arg7: memref<4x1xf32, #tpu.memory_space<vmem>>, %arg8: memref<4x32xf32, #tpu.memory_space<vmem>>, %arg9: memref<4x1xf32, #tpu.memory_space<vmem>>, %arg10: memref<1x4x256xf32, #tpu.memory_space<vmem>>) attributes {dimension_semantics = [#tpu.dimension_semantics<parallel>, #tpu.dimension_semantics<parallel>], iteration_bounds = array<i64: 2, 1>, scalar_prefetch = 0 : i64, scratch_operands = 0 : i64, tpu.core_type = #tpu.core_type<tc>, window_params = [{transform_indices = @transform_0, window_bounds = array<i64: 1, 4, 256>}, {transform_indices = @transform_1, window_bounds = array<i64: 1, 1, 256>}, {pipeline_mode = #tpu.pipeline_mode<synchronous>, transform_indices = @transform_2, window_bounds = array<i64: 32, 1>}, {pipeline_mode = #tpu.pipeline_mode<synchronous>, transform_indices = @transform_3, window_bounds = array<i64: 32, 1>}, {pipeline_mode = #tpu.pipeline_mode<synchronous>, transform_indices = @transform_4, window_bounds = array<i64: 4, 32>}, {pipeline_mode = #tpu.pipeline_mode<synchronous>, transform_indices = @transform_5, window_bounds = array<i64: 4, 1>}, {pipeline_mode = #tpu.pipeline_mode<synchronous>, transform_indices = @transform_6, window_bounds = array<i64: 4, 32>}, {pipeline_mode = #tpu.pipeline_mode<synchronous>, transform_indices = @transform_7, window_bounds = array<i64: 4, 1>}, {transform_indices = @transform_8, window_bounds = array<i64: 1, 4, 256>}]} {
    %c0 = arith.constant 0 : index
    %c0_0 = arith.constant 0 : index
    %c0_1 = arith.constant 0 : index
    %0 = vector.load %arg3[%c0, %c0_0, %c0_1] : memref<1x1x256xf32, #tpu.memory_space<vmem>>, vector<1x1x256xf32>
    %1 = vector.shape_cast %0 : vector<1x1x256xf32> to vector<1x256xf32>
    %c0_2 = arith.constant 0 : index
    %c0_3 = arith.constant 0 : index
    %2 = vector.load %arg4[%c0_2, %c0_3] : memref<32x1xf32, #tpu.memory_space<vmem>>, vector<32x1xf32>
    %3 = vector.broadcast %2 : vector<32x1xf32> to vector<32x256xf32>
    %4 = vector.broadcast %1 : vector<1x256xf32> to vector<32x256xf32>
    %5 = arith.mulf %3, %4 : vector<32x256xf32>
    %c0_4 = arith.constant 0 : index
    %c0_5 = arith.constant 0 : index
    %6 = vector.load %arg5[%c0_4, %c0_5] : memref<32x1xf32, #tpu.memory_space<vmem>>, vector<32x1xf32>
    %7 = vector.broadcast %6 : vector<32x1xf32> to vector<32x256xf32>
    %8 = arith.addf %5, %7 : vector<32x256xf32>
    %cst = arith.constant 0.000000e+00 : f32
    %9 = vector.broadcast %cst : f32 to vector<32x256xf32>
    %10 = arith.maximumf %8, %9 : vector<32x256xf32>
    %c0_6 = arith.constant 0 : index
    %c0_7 = arith.constant 0 : index
    %11 = vector.load %arg6[%c0_6, %c0_7] : memref<4x32xf32, #tpu.memory_space<vmem>>, vector<4x32xf32>
    %cst_8 = arith.constant dense<0.000000e+00> : vector<4x256xf32>
    %12 = tpu.matmul %11, %10, %cst_8 {dimension_numbers = #tpu.dot_dimension_numbers<[1], [0], [0], [1], [0, 0, 1, 1], [], []>, precision = #tpu.contract_precision<fp32>} : vector<4x32xf32>, vector<32x256xf32>, vector<4x256xf32> -> vector<4x256xf32>
    %c0_9 = arith.constant 0 : index
    %c0_10 = arith.constant 0 : index
    %13 = vector.load %arg7[%c0_9, %c0_10] : memref<4x1xf32, #tpu.memory_space<vmem>>, vector<4x1xf32>
    %14 = vector.broadcast %13 : vector<4x1xf32> to vector<4x256xf32>
    %15 = arith.addf %12, %14 : vector<4x256xf32>
    %c0_11 = arith.constant 0 : index
    %c0_12 = arith.constant 0 : index
    %c0_13 = arith.constant 0 : index
    %16 = vector.load %arg2[%c0_11, %c0_12, %c0_13] : memref<1x4x256xf32, #tpu.memory_space<vmem>>, vector<1x4x256xf32>
    %17 = vector.shape_cast %16 : vector<1x4x256xf32> to vector<4x256xf32>
    %18 = arith.mulf %17, %15 : vector<4x256xf32>
    %c0_14 = arith.constant 0 : index
    %c0_15 = arith.constant 0 : index
    %19 = vector.load %arg8[%c0_14, %c0_15] : memref<4x32xf32, #tpu.memory_space<vmem>>, vector<4x32xf32>
    %cst_16 = arith.constant dense<0.000000e+00> : vector<4x256xf32>
    %20 = tpu.matmul %19, %10, %cst_16 {dimension_numbers = #tpu.dot_dimension_numbers<[1], [0], [0], [1], [0, 0, 1, 1], [], []>, precision = #tpu.contract_precision<fp32>} : vector<4x32xf32>, vector<32x256xf32>, vector<4x256xf32> -> vector<4x256xf32>
    %c0_17 = arith.constant 0 : index
    %c0_18 = arith.constant 0 : index
    %21 = vector.load %arg9[%c0_17, %c0_18] : memref<4x1xf32, #tpu.memory_space<vmem>>, vector<4x1xf32>
    %22 = vector.broadcast %21 : vector<4x1xf32> to vector<4x256xf32>
    %23 = arith.addf %20, %22 : vector<4x256xf32>
    %24 = arith.addf %18, %23 : vector<4x256xf32>
    %c0_19 = arith.constant 0 : index
    %c0_20 = arith.constant 0 : index
    %c0_21 = arith.constant 0 : index
    %25 = vector.load %arg10[%c0_19, %c0_20, %c0_21] : memref<1x4x256xf32, #tpu.memory_space<vmem>>, vector<1x4x256xf32>
    %26 = vector.shape_cast %25 : vector<1x4x256xf32> to vector<4x256xf32>
    %27 = vector.shape_cast %24 : vector<4x256xf32> to vector<1x4x256xf32>
    tpu.vector_store %arg10[%c0_19, %c0_20, %c0_21], %27 {strides = array<i32>} : memref<1x4x256xf32, #tpu.memory_space<vmem>>, vector<1x4x256xf32>,
    return
  }
  func.func @transform_0(%arg0: i32, %arg1: i32) -> (i32, i32, i32) {
    %c0_i32 = arith.constant 0 : i32
    %c0_i32_0 = arith.constant 0 : i32
    return %arg0, %c0_i32, %arg1 : i32, i32, i32
  }
  func.func @transform_1(%arg0: i32, %arg1: i32) -> (i32, i32, i32) {
    %c0_i32 = arith.constant 0 : i32
    %c0_i32_0 = arith.constant 0 : i32
    return %arg0, %c0_i32, %arg1 : i32, i32, i32
  }
  func.func @transform_2(%arg0: i32, %arg1: i32) -> (i32, i32) {
    %c0_i32 = arith.constant 0 : i32
    %c0_i32_0 = arith.constant 0 : i32
    %c0_i32_1 = arith.constant 0 : i32
    return %c0_i32, %c0_i32_0 : i32, i32
  }
  func.func @transform_3(%arg0: i32, %arg1: i32) -> (i32, i32) {
    %c0_i32 = arith.constant 0 : i32
    %c0_i32_0 = arith.constant 0 : i32
    %c0_i32_1 = arith.constant 0 : i32
    return %c0_i32, %c0_i32_0 : i32, i32
  }
  func.func @transform_4(%arg0: i32, %arg1: i32) -> (i32, i32) {
    %c0_i32 = arith.constant 0 : i32
    %c0_i32_0 = arith.constant 0 : i32
    %c0_i32_1 = arith.constant 0 : i32
    return %c0_i32, %c0_i32_0 : i32, i32
  }
  func.func @transform_5(%arg0: i32, %arg1: i32) -> (i32, i32) {
    %c0_i32 = arith.constant 0 : i32
    %c0_i32_0 = arith.constant 0 : i32
    %c0_i32_1 = arith.constant 0 : i32
    return %c0_i32, %c0_i32_0 : i32, i32
  }
  func.func @transform_6(%arg0: i32, %arg1: i32) -> (i32, i32) {
    %c0_i32 = arith.constant 0 : i32
    %c0_i32_0 = arith.constant 0 : i32
    %c0_i32_1 = arith.constant 0 : i32
    return %c0_i32, %c0_i32_0 : i32, i32
  }
  func.func @transform_7(%arg0: i32, %arg1: i32) -> (i32, i32) {
    %c0_i32 = arith.constant 0 : i32
    %c0_i32_0 = arith.constant 0 : i32
    %c0_i32_1 = arith.constant 0 : i32
    return %c0_i32, %c0_i32_0 : i32, i32
  }
  func.func @transform_8(%arg0: i32, %arg1: i32) -> (i32, i32, i32) {
    %c0_i32 = arith.constant 0 : i32
    %c0_i32_0 = arith.constant 0 : i32
    return %arg0, %c0_i32, %arg1 : i32, i32, i32
  }
}

</mosaic_0001>

<llo_original>
// kernel: spade_norm_forward.1
$region0: #{spade_norm_forward.1}
  #allocation0 [shape = 'u32[]', space=smem, size = 0x4, offset = 0x4, fixed_abs, tag = 'smem constant byte address 0x4 - core index']
  #allocation1 [shape = 'u32[72,128]{1,0:T(1,128)}', space=vmem, size = 0x9000, scoped, tag = 'internal scratch']
  %s0 = inlined_call_operand.vmem [shape: f32[2,4,256], index: 0, kind: input, shape index: {}]
  %s1 = inlined_call_operand.vmem [shape: f32[2,1,256], index: 1, kind: input, shape index: {}]
  %s2 = inlined_call_operand.vmem [shape: f32[32,1], index: 2, kind: input, shape index: {}]
  %s3 = inlined_call_operand.vmem [shape: f32[32,1], index: 3, kind: input, shape index: {}]
  %s4 = inlined_call_operand.vmem [shape: f32[4,32], index: 4, kind: input, shape index: {}]
  %s5 = inlined_call_operand.vmem [shape: f32[4,1], index: 5, kind: input, shape index: {}]
  %s6 = inlined_call_operand.vmem [shape: f32[4,32], index: 6, kind: input, shape index: {}]
  %s7 = inlined_call_operand.vmem [shape: f32[4,1], index: 7, kind: input, shape index: {}]
  %s8 = inlined_call_operand.vmem [shape: f32[2,4,256], index: 8, kind: output, shape index: {}]
  %s9 = sld [smem:[#allocation0]]
  $region65: #{spade_norm_forward.1} parent=0
    _
  %s11 = ssub.s32 1, %s9
  %s12 = scalar_select 0, %s11, %s9
  loop: start=0, step=1, limit=4
  $region2: #{spade_norm_forward.1} parent=0 // loop_pre_header
    _
  $region3: #{spade_norm_forward.1} parent=0 // loop_header
    %s14 = sphi 0, %s18
    %p15 = scmp.ge.s32.totalorder %s14, 4
    %s21 = sphi 0, %s33
    %s22 = sphi 0, %s29
    %s23 = sphi 0, %s21
    %s24 = sphi 0, %s22
    %s25 = sphi 0, %s23
    %s26 = sphi 0, %s24
    %s38 = sphi 0, %s40
    %s41 = sphi 0, %s38
    %s42 = sphi 0, %s41
    %s58 = sphi 0, %s42
    %s66 = sphi 0, %s68
    %s69 = sphi 0, %s66
    %s70 = sphi 0, %s69
    %s86 = sphi 0, %s70
    %s90 = sphi 0, %s90
    %s92 = sphi 0, %s90
    %s93 = sphi 0, %s92
    %s107 = sphi 0, %s93
    %s111 = sphi 0, %s111
    %s113 = sphi 0, %s111
    %s114 = sphi 0, %s113
    %s128 = sphi 0, %s114
    %s132 = sphi 0, %s132
    %s134 = sphi 0, %s132
    %s135 = sphi 0, %s134
    %s149 = sphi 0, %s135
    %s153 = sphi 0, %s153
    %s155 = sphi 0, %s153
    %s156 = sphi 0, %s155
    %s170 = sphi 0, %s156
    %s174 = sphi 0, %s174
    %s176 = sphi 0, %s174
    %s177 = sphi 0, %s176
    %s191 = sphi 0, %s177
    %s195 = sphi 0, %s195
    %s197 = sphi 0, %s195
    %s198 = sphi 0, %s197
    %s212 = sphi 0, %s198
    %s220 = sphi 0, %s222
    %s223 = sphi 0, %s220
    %s224 = sphi 0, %s223
    %s240 = sphi 0, %s224
  $region4: #{spade_norm_forward.1} parent=0 // loop_header_branch
    %17 = sbr.rel (%p15) target = $region8
  $region5: #{spade_norm_forward.1} parent=0 // loop_body
    %s19 = ssub.s32 %s14, 1
    %s20 = ssub.s32 %s14, 2
    %s27 = sadd.s32 1, %s22
    %p28 = scmp.ge.s32.totalorder %s27, 1
    %s29 = scalar_select %p28, 0, %s27
    %s30 = sadd.s32 1, %s21
    %s31 = scalar_select %p28, %s30, %s21
    %p32 = scmp.ge.s32.totalorder %s31, 2
    %s33 = scalar_select %p32, 0, %s31
    %s34 = ssub.s32 %s21, %s33
    %s35 = ssub.s32 %s22, %s29
    %s36 = sor.u32 %s34, %s35
    %p37 = scmp.eq.s32.totalorder %s36, 0
    %s39 = sadd.s32 %s38, 1
    %s40 = scalar_select %p37, %s38, %s39
    %p43 = pneg %p37
    %p44 = scmp.eq.s32.totalorder %s14, 1
    %p45 = por %p43, %p44
    %p46 = scmp.ne.s32.totalorder %s38, %s41
    %p47 = scmp.eq.s32.totalorder %s14, 0
    %p48 = por %p46, %p47
    %p49 = scmp.ne.s32.totalorder %s38, %s41
    %p50 = scmp.eq.s32.totalorder %s19, 1
    %p51 = por %p49, %p50
    %p52 = scmp.ne.s32.totalorder %s41, %s42
    %p53 = scmp.eq.s32.totalorder %s19, 0
    %p54 = por %p52, %p53
    %p55 = scmp.ne.s32.totalorder %s41, %s42
    %p56 = scmp.eq.s32.totalorder %s20, 1
    %p57 = por %p55, %p56
    %p59 = scmp.ne.s32.totalorder %s42, %s58
    %p60 = scmp.eq.s32.totalorder %s20, 0
    %p61 = por %p59, %p60
    %s62 = ssub.s32 %s21, %s33
    %s63 = ssub.s32 %s22, %s29
    %s64 = sor.u32 %s62, %s63
    %p65 = scmp.eq.s32.totalorder %s64, 0
    %s67 = sadd.s32 %s66, 1
    %s68 = scalar_select %p65, %s66, %s67
    %p71 = pneg %p65
    %p72 = scmp.eq.s32.totalorder %s14, 1
    %p73 = por %p71, %p72
    %p74 = scmp.ne.s32.totalorder %s66, %s69
    %p75 = scmp.eq.s32.totalorder %s14, 0
    %p76 = por %p74, %p75
    %p77 = scmp.ne.s32.totalorder %s66, %s69
    %p78 = scmp.eq.s32.totalorder %s19, 1
    %p79 = por %p77, %p78
    %p80 = scmp.ne.s32.totalorder %s69, %s70
    %p81 = scmp.eq.s32.totalorder %s19, 0
    %p82 = por %p80, %p81
    %p83 = scmp.ne.s32.totalorder %s69, %s70
    %p84 = scmp.eq.s32.totalorder %s20, 1
    %p85 = por %p83, %p84
    %p87 = scmp.ne.s32.totalorder %s70, %s86
    %p88 = scmp.eq.s32.totalorder %s20, 0
    %p89 = por %p87, %p88
    %s91 = sadd.s32 %s90, 1
    %p94 = scmp.eq.s32.totalorder %s14, 1
    %p95 = scmp.ne.s32.totalorder %s90, %s92
    %p96 = scmp.eq.s32.totalorder %s14, 0
    %p97 = por %p95, %p96
    %p98 = scmp.ne.s32.totalorder %s90, %s92
    %p99 = scmp.eq.s32.totalorder %s19, 1
    %p100 = por %p98, %p99
    %p101 = scmp.ne.s32.totalorder %s92, %s93
    %p102 = scmp.eq.s32.totalorder %s19, 0
    %p103 = por %p101, %p102
    %p104 = scmp.ne.s32.totalorder %s92, %s93
    %p105 = scmp.eq.s32.totalorder %s20, 1
    %p106 = por %p104, %p105
    %p108 = scmp.ne.s32.totalorder %s93, %s107
    %p109 = scmp.eq.s32.totalorder %s20, 0
    %p110 = por %p108, %p109
    %s112 = sadd.s32 %s111, 1
    %p115 = scmp.eq.s32.totalorder %s14, 1
    %p116 = scmp.ne.s32.totalorder %s111, %s113
    %p117 = scmp.eq.s32.totalorder %s14, 0
    %p118 = por %p116, %p117
    %p119 = scmp.ne.s32.totalorder %s111, %s113
    %p120 = scmp.eq.s32.totalorder %s19, 1
    %p121 = por %p119, %p120
    %p122 = scmp.ne.s32.totalorder %s113, %s114
    %p123 = scmp.eq.s32.totalorder %s19, 0
    %p124 = por %p122, %p123
    %p125 = scmp.ne.s32.totalorder %s113, %s114
    %p126 = scmp.eq.s32.totalorder %s20, 1
    %p127 = por %p125, %p126
    %p129 = scmp.ne.s32.totalorder %s114, %s128
    %p130 = scmp.eq.s32.totalorder %s20, 0
    %p131 = por %p129, %p130
    %s133 = sadd.s32 %s132, 1
    %p136 = scmp.eq.s32.totalorder %s14, 1
    %p137 = scmp.ne.s32.totalorder %s132, %s134
    %p138 = scmp.eq.s32.totalorder %s14, 0
    %p139 = por %p137, %p138
    %p140 = scmp.ne.s32.totalorder %s132, %s134
    %p141 = scmp.eq.s32.totalorder %s19, 1
    %p142 = por %p140, %p141
    %p143 = scmp.ne.s32.totalorder %s134, %s135
    %p144 = scmp.eq.s32.totalorder %s19, 0
    %p145 = por %p143, %p144
    %p146 = scmp.ne.s32.totalorder %s134, %s135
    %p147 = scmp.eq.s32.totalorder %s20, 1
    %p148 = por %p146, %p147
    %p150 = scmp.ne.s32.totalorder %s135, %s149
    %p151 = scmp.eq.s32.totalorder %s20, 0
    %p152 = por %p150, %p151
    %s154 = sadd.s32 %s153, 1
    %p157 = scmp.eq.s32.totalorder %s14, 1
    %p158 = scmp.ne.s32.totalorder %s153, %s155
    %p159 = scmp.eq.s32.totalorder %s14, 0
    %p160 = por %p158, %p159
    %p161 = scmp.ne.s32.totalorder %s153, %s155
    %p162 = scmp.eq.s32.totalorder %s19, 1
    %p163 = por %p161, %p162
    %p164 = scmp.ne.s32.totalorder %s155, %s156
    %p165 = scmp.eq.s32.totalorder %s19, 0
    %p166 = por %p164, %p165
    %p167 = scmp.ne.s32.totalorder %s155, %s156
    %p168 = scmp.eq.s32.totalorder %s20, 1
    %p169 = por %p167, %p168
    %p171 = scmp.ne.s32.totalorder %s156, %s170
    %p172 = scmp.eq.s32.totalorder %s20, 0
    %p173 = por %p171, %p172
    %s175 = sadd.s32 %s174, 1
    %p178 = scmp.eq.s32.totalorder %s14, 1
    %p179 = scmp.ne.s32.totalorder %s174, %s176
    %p180 = scmp.eq.s32.totalorder %s14, 0
    %p181 = por %p179, %p180
    %p182 = scmp.ne.s32.totalorder %s174, %s176
    %p183 = scmp.eq.s32.totalorder %s19, 1
    %p184 = por %p182, %p183
    %p185 = scmp.ne.s32.totalorder %s176, %s177
    %p186 = scmp.eq.s32.totalorder %s19, 0
    %p187 = por %p185, %p186
    %p188 = scmp.ne.s32.totalorder %s176, %s177
    %p189 = scmp.eq.s32.totalorder %s20, 1
    %p190 = por %p188, %p189
    %p192 = scmp.ne.s32.totalorder %s177, %s191
    %p193 = scmp.eq.s32.totalorder %s20, 0
    %p194 = por %p192, %p193
    %s196 = sadd.s32 %s195, 1
    %p199 = scmp.eq.s32.totalorder %s14, 1
    %p200 = scmp.ne.s32.totalorder %s195, %s197
    %p201 = scmp.eq.s32.totalorder %s14, 0
    %p202 = por %p200, %p201
    %p203 = scmp.ne.s32.totalorder %s195, %s197
    %p204 = scmp.eq.s32.totalorder %s19, 1
    %p205 = por %p203, %p204
    %p206 = scmp.ne.s32.totalorder %s197, %s198
    %p207 = scmp.eq.s32.totalorder %s19, 0
    %p208 = por %p206, %p207
    %p209 = scmp.ne.s32.totalorder %s197, %s198
    %p210 = scmp.eq.s32.totalorder %s20, 1
    %p211 = por %p209, %p210
    %p213 = scmp.ne.s32.totalorder %s198, %s212
    %p214 = scmp.eq.s32.totalorder %s20, 0
    %p215 = por %p213, %p214
    %s216 = ssub.s32 %s21, %s33
    %s217 = ssub.s32 %s22, %s29
    %s218 = sor.u32 %s216, %s217
    %p219 = scmp.eq.s32.totalorder %s218, 0
    %s221 = sadd.s32 %s220, 1
    %s222 = scalar_select %p219, %s220, %s221
    %p225 = pneg %p219
    %p226 = scmp.eq.s32.totalorder %s14, 1
    %p227 = por %p225, %p226
    %p228 = scmp.ne.s32.totalorder %s220, %s223
    %p229 = scmp.eq.s32.totalorder %s14, 0
    %p230 = por %p228, %p229
    %p231 = scmp.ne.s32.totalorder %s220, %s223
    %p232 = scmp.eq.s32.totalorder %s19, 1
    %p233 = por %p231, %p232
    %p234 = scmp.ne.s32.totalorder %s223, %s224
    %p235 = scmp.eq.s32.totalorder %s19, 0
    %p236 = por %p234, %p235
    %p237 = scmp.ne.s32.totalorder %s223, %s224
    %p238 = scmp.eq.s32.totalorder %s20, 1
    %p239 = por %p237, %p238
    %p241 = scmp.ne.s32.totalorder %s224, %s240
    %p242 = scmp.eq.s32.totalorder %s20, 0
    %p243 = por %p241, %p242
    %p244 = scmp.le.s32.totalorder 1, %s14
    %p245 = scmp.lt.s32.totalorder %s14, 3
    %p246 = pnand %p244, %p245
    %p247 = pneg %p246
    // Predicated region
    $region9: #{spade_norm_forward.1} parent=5 // pred_check
      _
    $region10: #{spade_norm_forward.1} parent=5 // pred_check_branch
      %249 = sbr.rel (%p246) target = $region12
    $region11: #{spade_norm_forward.1} parent=5 // pred_region
      %s250 = ssub.s32 %s14, 1
      // Predicated region
      $region13: #{spade_norm_forward.1} parent=11 // pred_check
        %p251 = pneg %p103
      $region14: #{spade_norm_forward.1} parent=11 // pred_check_branch
        %253 = sbr.rel (%p251) target = $region16
      $region15: #{spade_norm_forward.1} parent=11 // pred_region
        _
      $region16: #{spade_norm_forward.1} parent=11 // pred_fallthru
        _
      // Predicated region
      $region17: #{spade_norm_forward.1} parent=11 // pred_check
        %p254 = pneg %p124
      $region18: #{spade_norm_forward.1} parent=11 // pred_check_branch
        %256 = sbr.rel (%p254) target = $region20
      $region19: #{spade_norm_forward.1} parent=11 // pred_region
        _
      $region20: #{spade_norm_forward.1} parent=11 // pred_fallthru
        _
      // Predicated region
      $region21: #{spade_norm_forward.1} parent=11 // pred_check
        %p257 = pneg %p145
      $region22: #{spade_norm_forward.1} parent=11 // pred_check_branch
        %259 = sbr.rel (%p257) target = $region24
      $region23: #{spade_norm_forward.1} parent=11 // pred_region
        _
      $region24: #{spade_norm_forward.1} parent=11 // pred_fallthru
        _
      // Predicated region
      $region25: #{spade_norm_forward.1} parent=11 // pred_check
        %p260 = pneg %p166
      $region26: #{spade_norm_forward.1} parent=11 // pred_check_branch
        %262 = sbr.rel (%p260) target = $region28
      $region27: #{spade_norm_forward.1} parent=11 // pred_region
        _
      $region28: #{spade_norm_forward.1} parent=11 // pred_fallthru
        _
      // Predicated region
      $region29: #{spade_norm_forward.1} parent=11 // pred_check
        %p263 = pneg %p187
      $region30: #{spade_norm_forward.1} parent=11 // pred_check_branch
        %265 = sbr.rel (%p263) target = $region32
      $region31: #{spade_norm_forward.1} parent=11 // pred_region
        _
      $region32: #{spade_norm_forward.1} parent=11 // pred_fallthru
        _
      // Predicated region
      $region33: #{spade_norm_forward.1} parent=11 // pred_check
        %p266 = pneg %p208
      $region34: #{spade_norm_forward.1} parent=11 // pred_check_branch
        %268 = sbr.rel (%p266) target = $region36
      $region35: #{spade_norm_forward.1} parent=11 // pred_region
        _
      $region36: #{spade_norm_forward.1} parent=11 // pred_fallthru
        _
    $region12: #{spade_norm_forward.1} parent=5 // pred_fallthru
      _
    %p269 = scmp.lt.s32.totalorder %s14, 2
    // Predicated region
    $region37: #{spade_norm_forward.1} parent=5 // pred_check
      %p270 = pneg %p269
    $region38: #{spade_norm_forward.1} parent=5 // pred_check_branch
      %272 = sbr.rel (%p270) target = $region40
    $region39: #{spade_norm_forward.1} parent=5 // pred_region
      // Predicated region
      $region41: #{spade_norm_forward.1} parent=39 // pred_check
        %p273 = pneg %p48
      $region42: #{spade_norm_forward.1} parent=39 // pred_check_branch
        %275 = sbr.rel (%p273) target = $region44
      $region43: #{spade_norm_forward.1} parent=39 // pred_region
        %s276 = smul.u32 2, %s22
        %p277 = scmp.lt.s32.totalorder %s21, 1
        %s278 = scalar_select %p277, %s21, 1
        %p279 = scmp.lt.s32.totalorder %s276, 1
        %s280 = scalar_select %p279, %s276, 1
        %s281 = smul.addr %s278, 2
        %s282 = sadd.s32 %s280, %s281
        %s283 = smul.addr %s282, 4
        %s284 = scalar_lea.vmem %s0, %s283
        %s285 = smul.u32 2, %s22
      $region44: #{spade_norm_forward.1} parent=39 // pred_fallthru
        _
      // Predicated region
      $region45: #{spade_norm_forward.1} parent=39 // pred_check
        %p286 = pneg %p76
      $region46: #{spade_norm_forward.1} parent=39 // pred_check_branch
        %288 = sbr.rel (%p286) target = $region48
      $region47: #{spade_norm_forward.1} parent=39 // pred_region
        %s289 = smul.u32 2, %s22
        %p290 = scmp.lt.s32.totalorder %s21, 1
        %s291 = scalar_select %p290, %s21, 1
        %p292 = scmp.lt.s32.totalorder %s289, 1
        %s293 = scalar_select %p292, %s289, 1
        %s294 = smul.addr %s291, 2
        %s295 = sadd.s32 %s293, %s294
        %s296 = scalar_lea.vmem %s1, %s295
        %s297 = smul.u32 2, %s22
      $region48: #{spade_norm_forward.1} parent=39 // pred_fallthru
        _
    $region40: #{spade_norm_forward.1} parent=5 // pred_fallthru
      _
    %p298 = scmp.le.s32.totalorder 1, %s14
    %p299 = scmp.lt.s32.totalorder %s14, 3
    %p300 = pnand %p298, %p299
    %p301 = pneg %p300
    // Predicated region
    $region49: #{spade_norm_forward.1} parent=5 // pred_check
      _
    $region50: #{spade_norm_forward.1} parent=5 // pred_check_branch
      %303 = sbr.rel (%p300) target = $region52
    $region51: #{spade_norm_forward.1} parent=5 // pred_region
      %s304 = ssub.s32 %s14, 1
      %s305 = smul.u32 2, %s24
      %p306 = scmp.lt.s32.totalorder %s23, 1
      %s307 = scalar_select %p306, %s23, 1
      %p308 = scmp.lt.s32.totalorder %s305, 1
      %s309 = scalar_select %p308, %s305, 1
      %s310 = smul.addr %s307, 2
      %s311 = sadd.s32 %s309, %s310
      %s312 = smul.addr %s311, 4
      %s313 = scalar_lea.vmem %s0, %s312
      %p314 = pneg %p54
      %p315 = pneg %p51
      %s316 = smul.u32 2, %s24
      %p317 = scmp.lt.s32.totalorder %s23, 1
      %s318 = scalar_select %p317, %s23, 1
      %p319 = scmp.lt.s32.totalorder %s316, 1
      %s320 = scalar_select %p319, %s316, 1
      %s321 = smul.addr %s318, 2
      %s322 = sadd.s32 %s320, %s321
      %s323 = scalar_lea.vmem %s1, %s322
      %p324 = pneg %p82
      %p325 = pneg %p79
      %p326 = pneg %p103
      %p327 = pneg %p100
      %p328 = pneg %p124
      %p329 = pneg %p121
      %p330 = pneg %p145
      %p331 = pneg %p142
      %p332 = pneg %p166
      %p333 = pneg %p163
      %p334 = pneg %p187
      %p335 = pneg %p184
      %p336 = pneg %p208
      %p337 = pneg %p205
      %p338 = pneg %p236
      %p339 = pneg %p233
      %s340 = smul.u32 2, %s24
      %p341 = scmp.lt.s32.totalorder %s23, 1
      %s342 = scalar_select %p341, %s23, 1
      %p343 = scmp.lt.s32.totalorder %s340, 1
      %s344 = scalar_select %p343, %s340, 1
      %s345 = smul.addr %s342, 2
      %s346 = sadd.s32 %s344, %s345
      %s347 = smul.addr %s346, 4
      %s348 = scalar_lea.vmem %s8, %s347
      %s349 = smul.u32 2, %s24
      %p350 = scmp.lt.s32.totalorder %s23, 1
      %s351 = scalar_select %p350, %s23, 1
      %p352 = scmp.lt.s32.totalorder %s349, 1
      %s353 = scalar_select %p352, %s349, 1
      %s354 = smul.addr %s351, 2
      %s355 = sadd.s32 %s353, %s354
      %s356 = smul.addr %s355, 4
      %s357 = scalar_lea.vmem %s0, %s356
      %s358 = smul.u32 2, %s24
      %s359 = smul.u32 2, %s24
      %p360 = scmp.lt.s32.totalorder %s23, 1
      %s361 = scalar_select %p360, %s23, 1
      %p362 = scmp.lt.s32.totalorder %s359, 1
      %s363 = scalar_select %p362, %s359, 1
      %s364 = smul.addr %s361, 2
      %s365 = sadd.s32 %s363, %s364
      %s366 = scalar_lea.vmem %s1, %s365
      %s367 = smul.u32 2, %s24
      %s368 = smul.u32 2, %s24
      %p369 = scmp.lt.s32.totalorder %s23, 1
      %s370 = scalar_select %p369, %s23, 1
      %p371 = scmp.lt.s32.totalorder %s368, 1
      %s372 = scalar_select %p371, %s368, 1
      %s373 = smul.addr %s370, 2
      %s374 = sadd.s32 %s372, %s373
      %s375 = smul.addr %s374, 4
      %s376 = scalar_lea.vmem %s8, %s375
      %s377 = smul.u32 2, %s24
      %v378 = vld [vmem:[%s366] sm:$0x3]
      %v379 = vld [vmem:[%s2] sm:$0xff]
      %v380 = vld [vmem:[%s2 + $0x8] sm:$0xff]
      %v381 = vld [vmem:[%s2 + $0x10] sm:$0xff]
      %v382 = vld [vmem:[%s2 + $0x18] sm:$0xff]
      %384 = vset.pattern.permute.xlu0 0
      %385 = vperm.xlu0 %384, %v379
      %v386 = vpop.permute.xlu0 %385
      %389 = vset.pattern.permute.xlu0 0
      %390 = vperm.xlu0 %389, %v380
      %v391 = vpop.permute.xlu0 %390
      %394 = vset.pattern.permute.xlu0 0
      %395 = vperm.xlu0 %394, %v381
      %v396 = vpop.permute.xlu0 %395
      %399 = vset.pattern.permute.xlu0 0
      %400 = vperm.xlu0 %399, %v382
      %v401 = vpop.permute.xlu0 %400
      %v404 = vperm.slane %v378, 0
      %v405 = vperm.slane %v378, 1
      %v408 = vmul.f32 %v386, %v404
      %v409 = vmul.f32 %v386, %v405
      %v410 = vmul.f32 %v391, %v404
      %v411 = vmul.f32 %v391, %v405
      %v412 = vmul.f32 %v396, %v404
      %v413 = vmul.f32 %v396, %v405
      %v414 = vmul.f32 %v401, %v404
      %v415 = vmul.f32 %v401, %v405
      %v416 = vld [vmem:[%s3] sm:$0xff]
      %v417 = vld [vmem:[%s3 + $0x8] sm:$0xff]
      %v418 = vld [vmem:[%s3 + $0x10] sm:$0xff]
      %v419 = vld [vmem:[%s3 + $0x18] sm:$0xff]
      %421 = vset.pattern.permute.xlu0 0
      %422 = vperm.xlu0 %421, %v416
      %v423 = vpop.permute.xlu0 %422
      %426 = vset.pattern.permute.xlu0 0
      %427 = vperm.xlu0 %426, %v417
      %v428 = vpop.permute.xlu0 %427
      %431 = vset.pattern.permute.xlu0 0
      %432 = vperm.xlu0 %431, %v418
      %v433 = vpop.permute.xlu0 %432
      %436 = vset.pattern.permute.xlu0 0
      %437 = vperm.xlu0 %436, %v419
      %v438 = vpop.permute.xlu0 %437
      %v440 = vadd.f32 %v408, %v423
      %v441 = vadd.f32 %v409, %v423
      %v442 = vadd.f32 %v410, %v428
      %v443 = vadd.f32 %v411, %v428
      %v444 = vadd.f32 %v412, %v433
      %v445 = vadd.f32 %v413, %v433
      %v446 = vadd.f32 %v414, %v438
      %v447 = vadd.f32 %v415, %v438
      %v448 = vmax.f32 %v440, 0.0
      %v449 = vmax.f32 %v441, 0.0
      %v450 = vmax.f32 %v442, 0.0
      %v451 = vmax.f32 %v443, 0.0
      %v452 = vmax.f32 %v444, 0.0
      %v453 = vmax.f32 %v445, 0.0
      %v454 = vmax.f32 %v446, 0.0
      %v455 = vmax.f32 %v447, 0.0
      %v456 = vld [vmem:[%s4] sm:$0xf]
      %v457 = vld [vmem:[%s5] sm:$0xf]
      %459 = vset.pattern.permute.xlu0 0
      %460 = vperm.xlu0 %459, %v457
      %v461 = vpop.permute.xlu0 %460
      %vm463 = vcmask 261120
      %v465 = vsel %vm463, %v456, 0
      %467 = vmatpush.msra.mxu0 0.0
      %468 = vmatpush.msra.mxu0 0.0
      %469 = vmatpush.msra.mxu0 0.0
      %470 = vmatpush.msra.mxu0 0.0
      %471 = vmatpush.msra.mxu0 0.0
      %472 = vmatpush.msra.mxu0 0.0
      %473 = vmatpush.msra.mxu0 0.0
      %474 = vmatpush.msra.mxu0 0.0
      %475 = vmatpush.msra.mxu0 0.0
      %476 = vmatpush.msra.mxu0 0.0
      %477 = vmatpush.msra.mxu0 0.0
      %478 = vmatpush.msra.mxu0 0.0
      %v479 = vand.u32 %v454, 4294901760
      %480 = vmatpush.msra.mxu0 %v479
      %v481 = vand.u32 %v452, 4294901760
      %482 = vmatpush.msra.mxu0 %v481
      %v483 = vand.u32 %v450, 4294901760
      %484 = vmatpush.msra.mxu0 %v483
      %v485 = vand.u32 %v448, 4294901760
      %486 = vmatpush.msra.mxu0 %v485
      %v487 = vand.u32 %v465, 4294901760
      %v488 = vsub.f32 %v465, %v487
      %v489 = vand.u32 %v488, 4294901760
      %v490 = vsub.f32 %v488, %v489
      %v491 = vand.u32 %v490, 4294901760
      %492 = vmatmul.f32.gmra.mxu0 %v491
      %v493 = vpop.f32.mrf.mxu0
      %v494 = vadd.f32 %v461, %v493
      %495 = vdwg.mxu0
      %496 = vmatpush.msra.mxu0 0.0
      %497 = vmatpush.msra.mxu0 0.0
      %498 = vmatpush.msra.mxu0 0.0
      %499 = vmatpush.msra.mxu0 0.0
      %500 = vmatpush.msra.mxu0 0.0
      %501 = vmatpush.msra.mxu0 0.0
      %502 = vmatpush.msra.mxu0 0.0
      %503 = vmatpush.msra.mxu0 0.0
      %504 = vmatpush.msra.mxu0 0.0
      %505 = vmatpush.msra.mxu0 0.0
      %506 = vmatpush.msra.mxu0 0.0
      %507 = vmatpush.msra.mxu0 0.0
      %v508 = vand.u32 %v454, 4294901760
      %v509 = vsub.f32 %v454, %v508
      %v510 = vand.u32 %v509, 4294901760
      %v511 = vsub.f32 %v509, %v510
      %v512 = vand.u32 %v511, 4294901760
      %513 = vmatpush.msra.mxu0 %v512
      %v514 = vand.u32 %v452, 4294901760
      %v515 = vsub.f32 %v452, %v514
      %v516 = vand.u32 %v515, 4294901760
      %v517 = vsub.f32 %v515, %v516
      %v518 = vand.u32 %v517, 4294901760
      %519 = vmatpush.msra.mxu0 %v518
      %v520 = vand.u32 %v450, 4294901760
      %v521 = vsub.f32 %v450, %v520
      %v522 = vand.u32 %v521, 4294901760
      %v523 = vsub.f32 %v521, %v522
      %v524 = vand.u32 %v523, 4294901760
      %525 = vmatpush.msra.mxu0 %v524
      %v526 = vand.u32 %v448, 4294901760
      %v527 = vsub.f32 %v448, %v526
      %v528 = vand.u32 %v527, 4294901760
      %v529 = vsub.f32 %v527, %v528
      %v530 = vand.u32 %v529, 4294901760
      %531 = vmatpush.msra.mxu0 %v530
      %v532 = vand.u32 %v465, 4294901760
      %533 = vmatmul.f32.gmra.mxu0 %v532
      %v534 = vpop.f32.mrf.mxu0
      %v535 = vadd.f32 %v494, %v534
      %536 = vdwg.mxu0
      %537 = vmatpush.msra.mxu0 0.0
      %538 = vmatpush.msra.mxu0 0.0
      %539 = vmatpush.msra.mxu0 0.0
      %540 = vmatpush.msra.mxu0 0.0
      %541 = vmatpush.msra.mxu0 0.0
      %542 = vmatpush.msra.mxu0 0.0
      %543 = vmatpush.msra.mxu0 0.0
      %544 = vmatpush.msra.mxu0 0.0
      %545 = vmatpush.msra.mxu0 0.0
      %546 = vmatpush.msra.mxu0 0.0
      %547 = vmatpush.msra.mxu0 0.0
      %548 = vmatpush.msra.mxu0 0.0
      %v549 = vand.u32 %v454, 4294901760
      %v550 = vsub.f32 %v454, %v549
      %551 = vmatpush.msra.mxu0 %v550
      %v552 = vand.u32 %v452, 4294901760
      %v553 = vsub.f32 %v452, %v552
      %554 = vmatpush.msra.mxu0 %v553
      %v555 = vand.u32 %v450, 4294901760
      %v556 = vsub.f32 %v450, %v555
      %557 = vmatpush.msra.mxu0 %v556
      %v558 = vand.u32 %v448, 4294901760
      %v559 = vsub.f32 %v448, %v558
      %560 = vmatpush.msra.mxu0 %v559
      %v561 = vand.u32 %v465, 4294901760
      %v562 = vsub.f32 %v465, %v561
      %563 = vmatmul.f32.gmra.mxu0 %v562
      %v564 = vpop.f32.mrf.mxu0
      %v565 = vadd.f32 %v535, %v564
      %566 = vdwg.mxu0
      %567 = vmatpush.msra.mxu0 0.0
      %568 = vmatpush.msra.mxu0 0.0
      %569 = vmatpush.msra.mxu0 0.0
      %570 = vmatpush.msra.mxu0 0.0
      %571 = vmatpush.msra.mxu0 0.0
      %572 = vmatpush.msra.mxu0 0.0
      %573 = vmatpush.msra.mxu0 0.0
      %574 = vmatpush.msra.mxu0 0.0
      %575 = vmatpush.msra.mxu0 0.0
      %576 = vmatpush.msra.mxu0 0.0
      %577 = vmatpush.msra.mxu0 0.0
      %578 = vmatpush.msra.mxu0 0.0
      %v579 = vand.u32 %v454, 4294901760
      %580 = vmatpush.msra.mxu0 %v579
      %v581 = vand.u32 %v452, 4294901760
      %582 = vmatpush.msra.mxu0 %v581
      %v583 = vand.u32 %v450, 4294901760
      %584 = vmatpush.msra.mxu0 %v583
      %v585 = vand.u32 %v448, 4294901760
      %586 = vmatpush.msra.mxu0 %v585
      %v587 = vand.u32 %v465, 4294901760
      %v588 = vsub.f32 %v465, %v587
      %v589 = vand.u32 %v588, 4294901760
      %590 = vmatmul.f32.gmra.mxu0 %v589
      %v591 = vpop.f32.mrf.mxu0
      %v592 = vadd.f32 %v565, %v591
      %593 = vdwg.mxu0
      %594 = vmatpush.msra.mxu0 0.0
      %595 = vmatpush.msra.mxu0 0.0
      %596 = vmatpush.msra.mxu0 0.0
      %597 = vmatpush.msra.mxu0 0.0
      %598 = vmatpush.msra.mxu0 0.0
      %599 = vmatpush.msra.mxu0 0.0
      %600 = vmatpush.msra.mxu0 0.0
      %601 = vmatpush.msra.mxu0 0.0
      %602 = vmatpush.msra.mxu0 0.0
      %603 = vmatpush.msra.mxu0 0.0
      %604 = vmatpush.msra.mxu0 0.0
      %605 = vmatpush.msra.mxu0 0.0
      %v606 = vand.u32 %v454, 4294901760
      %v607 = vsub.f32 %v454, %v606
      %v608 = vand.u32 %v607, 4294901760
      %609 = vmatpush.msra.mxu0 %v608
      %v610 = vand.u32 %v452, 4294901760
      %v611 = vsub.f32 %v452, %v610
      %v612 = vand.u32 %v611, 4294901760
      %613 = vmatpush.msra.mxu0 %v612
      %v614 = vand.u32 %v450, 4294901760
      %v615 = vsub.f32 %v450, %v614
      %v616 = vand.u32 %v615, 4294901760
      %617 = vmatpush.msra.mxu0 %v616
      %v618 = vand.u32 %v448, 4294901760
      %v619 = vsub.f32 %v448, %v618
      %v620 = vand.u32 %v619, 4294901760
      %621 = vmatpush.msra.mxu0 %v620
      %v622 = vand.u32 %v465, 4294901760
      %623 = vmatmul.f32.gmra.mxu0 %v622
      %v624 = vpop.f32.mrf.mxu0
      %v625 = vadd.f32 %v592, %v624
      %626 = vdwg.mxu0
      %627 = vmatpush.msra.mxu0 0.0
      %628 = vmatpush.msra.mxu0 0.0
      %629 = vmatpush.msra.mxu0 0.0
      %630 = vmatpush.msra.mxu0 0.0
      %631 = vmatpush.msra.mxu0 0.0
      %632 = vmatpush.msra.mxu0 0.0
      %633 = vmatpush.msra.mxu0 0.0
      %634 = vmatpush.msra.mxu0 0.0
      %635 = vmatpush.msra.mxu0 0.0
      %636 = vmatpush.msra.mxu0 0.0
      %637 = vmatpush.msra.mxu0 0.0
      %638 = vmatpush.msra.mxu0 0.0
      %v639 = vand.u32 %v454, 4294901760
      %640 = vmatpush.msra.mxu0 %v639
      %v641 = vand.u32 %v452, 4294901760
      %642 = vmatpush.msra.mxu0 %v641
      %v643 = vand.u32 %v450, 4294901760
      %644 = vmatpush.msra.mxu0 %v643
      %v645 = vand.u32 %v448, 4294901760
      %646 = vmatpush.msra.mxu0 %v645
      %v647 = vand.u32 %v465, 4294901760
      %648 = vmatmul.f32.gmra.mxu0 %v647
      %v649 = vpop.f32.mrf.mxu0
      %v650 = vadd.f32 %v625, %v649
      %651 = vdwg.mxu0
      %652 = vmatpush.msra.mxu0 0.0
      %653 = vmatpush.msra.mxu0 0.0
      %654 = vmatpush.msra.mxu0 0.0
      %655 = vmatpush.msra.mxu0 0.0
      %656 = vmatpush.msra.mxu0 0.0
      %657 = vmatpush.msra.mxu0 0.0
      %658 = vmatpush.msra.mxu0 0.0
      %659 = vmatpush.msra.mxu0 0.0
      %660 = vmatpush.msra.mxu0 0.0
      %661 = vmatpush.msra.mxu0 0.0
      %662 = vmatpush.msra.mxu0 0.0
      %663 = vmatpush.msra.mxu0 0.0
      %v664 = vand.u32 %v455, 4294901760
      %665 = vmatpush.msra.mxu0 %v664
      %v666 = vand.u32 %v453, 4294901760
      %667 = vmatpush.msra.mxu0 %v666
      %v668 = vand.u32 %v451, 4294901760
      %669 = vmatpush.msra.mxu0 %v668
      %v670 = vand.u32 %v449, 4294901760
      %671 = vmatpush.msra.mxu0 %v670
      %v672 = vand.u32 %v465, 4294901760
      %v673 = vsub.f32 %v465, %v672
      %v674 = vand.u32 %v673, 4294901760
      %v675 = vsub.f32 %v673, %v674
      %v676 = vand.u32 %v675, 4294901760
      %677 = vmatmul.f32.gmra.mxu0 %v676
      %v678 = vpop.f32.mrf.mxu0
      %v679 = vadd.f32 %v461, %v678
      %680 = vdwg.mxu0
      %681 = vmatpush.msra.mxu0 0.0
      %682 = vmatpush.msra.mxu0 0.0
      %683 = vmatpush.msra.mxu0 0.0
      %684 = vmatpush.msra.mxu0 0.0
      %685 = vmatpush.msra.mxu0 0.0
      %686 = vmatpush.msra.mxu0 0.0
      %687 = vmatpush.msra.mxu0 0.0
      %688 = vmatpush.msra.mxu0 0.0
      %689 = vmatpush.msra.mxu0 0.0
      %690 = vmatpush.msra.mxu0 0.0
      %691 = vmatpush.msra.mxu0 0.0
      %692 = vmatpush.msra.mxu0 0.0
      %v693 = vand.u32 %v455, 4294901760
      %v694 = vsub.f32 %v455, %v693
      %v695 = vand.u32 %v694, 4294901760
      %v696 = vsub.f32 %v694, %v695
      %v697 = vand.u32 %v696, 4294901760
      %698 = vmatpush.msra.mxu0 %v697
      %v699 = vand.u32 %v453, 4294901760
      %v700 = vsub.f32 %v453, %v699
      %v701 = vand.u32 %v700, 4294901760
      %v702 = vsub.f32 %v700, %v701
      %v703 = vand.u32 %v702, 4294901760
      %704 = vmatpush.msra.mxu0 %v703
      %v705 = vand.u32 %v451, 4294901760
      %v706 = vsub.f32 %v451, %v705
      %v707 = vand.u32 %v706, 4294901760
      %v708 = vsub.f32 %v706, %v707
      %v709 = vand.u32 %v708, 4294901760
      %710 = vmatpush.msra.mxu0 %v709
      %v711 = vand.u32 %v449, 4294901760
      %v712 = vsub.f32 %v449, %v711
      %v713 = vand.u32 %v712, 4294901760
      %v714 = vsub.f32 %v712, %v713
      %v715 = vand.u32 %v714, 4294901760
      %716 = vmatpush.msra.mxu0 %v715
      %v717 = vand.u32 %v465, 4294901760
      %718 = vmatmul.f32.gmra.mxu0 %v717
      %v719 = vpop.f32.mrf.mxu0
      %v720 = vadd.f32 %v679, %v719
      %721 = vdwg.mxu0
      %722 = vmatpush.msra.mxu0 0.0
      %723 = vmatpush.msra.mxu0 0.0
      %724 = vmatpush.msra.mxu0 0.0
      %725 = vmatpush.msra.mxu0 0.0
      %726 = vmatpush.msra.mxu0 0.0
      %727 = vmatpush.msra.mxu0 0.0
      %728 = vmatpush.msra.mxu0 0.0
      %729 = vmatpush.msra.mxu0 0.0
      %730 = vmatpush.msra.mxu0 0.0
      %731 = vmatpush.msra.mxu0 0.0
      %732 = vmatpush.msra.mxu0 0.0
      %733 = vmatpush.msra.mxu0 0.0
      %v734 = vand.u32 %v455, 4294901760
      %v735 = vsub.f32 %v455, %v734
      %736 = vmatpush.msra.mxu0 %v735
      %v737 = vand.u32 %v453, 4294901760
      %v738 = vsub.f32 %v453, %v737
      %739 = vmatpush.msra.mxu0 %v738
      %v740 = vand.u32 %v451, 4294901760
      %v741 = vsub.f32 %v451, %v740
      %742 = vmatpush.msra.mxu0 %v741
      %v743 = vand.u32 %v449, 4294901760
      %v744 = vsub.f32 %v449, %v743
      %745 = vmatpush.msra.mxu0 %v744
      %v746 = vand.u32 %v465, 4294901760
      %v747 = vsub.f32 %v465, %v746
      %748 = vmatmul.f32.gmra.mxu0 %v747
      %v749 = vpop.f32.mrf.mxu0
      %v750 = vadd.f32 %v720, %v749
      %751 = vdwg.mxu0
      %752 = vmatpush.msra.mxu0 0.0
      %753 = vmatpush.msra.mxu0 0.0
      %754 = vmatpush.msra.mxu0 0.0
      %755 = vmatpush.msra.mxu0 0.0
      %756 = vmatpush.msra.mxu0 0.0
      %757 = vmatpush.msra.mxu0 0.0
      %758 = vmatpush.msra.mxu0 0.0
      %759 = vmatpush.msra.mxu0 0.0
      %760 = vmatpush.msra.mxu0 0.0
      %761 = vmatpush.msra.mxu0 0.0
      %762 = vmatpush.msra.mxu0 0.0
      %763 = vmatpush.msra.mxu0 0.0
      %v764 = vand.u32 %v455, 4294901760
      %765 = vmatpush.msra.mxu0 %v764
      %v766 = vand.u32 %v453, 4294901760
      %767 = vmatpush.msra.mxu0 %v766
      %v768 = vand.u32 %v451, 4294901760
      %769 = vmatpush.msra.mxu0 %v768
      %v770 = vand.u32 %v449, 4294901760
      %771 = vmatpush.msra.mxu0 %v770
      %v772 = vand.u32 %v465, 4294901760
      %v773 = vsub.f32 %v465, %v772
      %v774 = vand.u32 %v773, 4294901760
      %775 = vmatmul.f32.gmra.mxu0 %v774
      %v776 = vpop.f32.mrf.mxu0
      %v777 = vadd.f32 %v750, %v776
      %778 = vdwg.mxu0
      %779 = vmatpush.msra.mxu0 0.0
      %780 = vmatpush.msra.mxu0 0.0
      %781 = vmatpush.msra.mxu0 0.0
      %782 = vmatpush.msra.mxu0 0.0
      %783 = vmatpush.msra.mxu0 0.0
      %784 = vmatpush.msra.mxu0 0.0
      %785 = vmatpush.msra.mxu0 0.0
      %786 = vmatpush.msra.mxu0 0.0
      %787 = vmatpush.msra.mxu0 0.0
      %788 = vmatpush.msra.mxu0 0.0
      %789 = vmatpush.msra.mxu0 0.0
      %790 = vmatpush.msra.mxu0 0.0
      %v791 = vand.u32 %v455, 4294901760
      %v792 = vsub.f32 %v455, %v791
      %v793 = vand.u32 %v792, 4294901760
      %794 = vmatpush.msra.mxu0 %v793
      %v795 = vand.u32 %v453, 4294901760
      %v796 = vsub.f32 %v453, %v795
      %v797 = vand.u32 %v796, 4294901760
      %798 = vmatpush.msra.mxu0 %v797
      %v799 = vand.u32 %v451, 4294901760
      %v800 = vsub.f32 %v451, %v799
      %v801 = vand.u32 %v800, 4294901760
      %802 = vmatpush.msra.mxu0 %v801
      %v803 = vand.u32 %v449, 4294901760
      %v804 = vsub.f32 %v449, %v803
      %v805 = vand.u32 %v804, 4294901760
      %806 = vmatpush.msra.mxu0 %v805
      %v807 = vand.u32 %v465, 4294901760
      %808 = vmatmul.f32.gmra.mxu0 %v807
      %v809 = vpop.f32.mrf.mxu0
      %v810 = vadd.f32 %v777, %v809
      %811 = vdwg.mxu0
      %812 = vmatpush.msra.mxu0 0.0
      %813 = vmatpush.msra.mxu0 0.0
      %814 = vmatpush.msra.mxu0 0.0
      %815 = vmatpush.msra.mxu0 0.0
      %816 = vmatpush.msra.mxu0 0.0
      %817 = vmatpush.msra.mxu0 0.0
      %818 = vmatpush.msra.mxu0 0.0
      %819 = vmatpush.msra.mxu0 0.0
      %820 = vmatpush.msra.mxu0 0.0
      %821 = vmatpush.msra.mxu0 0.0
      %822 = vmatpush.msra.mxu0 0.0
      %823 = vmatpush.msra.mxu0 0.0
      %v824 = vand.u32 %v455, 4294901760
      %825 = vmatpush.msra.mxu0 %v824
      %v826 = vand.u32 %v453, 4294901760
      %827 = vmatpush.msra.mxu0 %v826
      %v828 = vand.u32 %v451, 4294901760
      %829 = vmatpush.msra.mxu0 %v828
      %v830 = vand.u32 %v449, 4294901760
      %831 = vmatpush.msra.mxu0 %v830
      %v832 = vand.u32 %v465, 4294901760
      %833 = vmatmul.f32.gmra.mxu0 %v832
      %v834 = vpop.f32.mrf.mxu0
      %v835 = vadd.f32 %v810, %v834
      %836 = vdwg.mxu0
      %v837 = vld [vmem:[%s357] sm:$0xff]
      %v840 = vrot.slane %v835, 4
      %vm841 = vcmask 1043456
      %v842 = vsel %vm841, %v650, %v840
      %v844 = vmul.f32 %v837, %v842
      %v845 = vld [vmem:[%s6] sm:$0xf]
      %v846 = vld [vmem:[%s7] sm:$0xf]
      %848 = vset.pattern.permute.xlu0 0
      %849 = vperm.xlu0 %848, %v846
      %v850 = vpop.permute.xlu0 %849
      %v853 = vsel %vm463, %v845, 0
      %855 = vmatpush.msra.mxu0 0.0
      %856 = vmatpush.msra.mxu0 0.0
      %857 = vmatpush.msra.mxu0 0.0
      %858 = vmatpush.msra.mxu0 0.0
      %859 = vmatpush.msra.mxu0 0.0
      %860 = vmatpush.msra.mxu0 0.0
      %861 = vmatpush.msra.mxu0 0.0
      %862 = vmatpush.msra.mxu0 0.0
      %863 = vmatpush.msra.mxu0 0.0
      %864 = vmatpush.msra.mxu0 0.0
      %865 = vmatpush.msra.mxu0 0.0
      %866 = vmatpush.msra.mxu0 0.0
      %v867 = vand.u32 %v454, 4294901760
      %868 = vmatpush.msra.mxu0 %v867
      %v869 = vand.u32 %v452, 4294901760
      %870 = vmatpush.msra.mxu0 %v869
      %v871 = vand.u32 %v450, 4294901760
      %872 = vmatpush.msra.mxu0 %v871
      %v873 = vand.u32 %v448, 4294901760
      %874 = vmatpush.msra.mxu0 %v873
      %v875 = vand.u32 %v853, 4294901760
      %v876 = vsub.f32 %v853, %v875
      %v877 = vand.u32 %v876, 4294901760
      %v878 = vsub.f32 %v876, %v877
      %v879 = vand.u32 %v878, 4294901760
      %880 = vmatmul.f32.gmra.mxu0 %v879
      %v881 = vpop.f32.mrf.mxu0
      %v882 = vadd.f32 %v850, %v881
      %883 = vdwg.mxu0
      %884 = vmatpush.msra.mxu0 0.0
      %885 = vmatpush.msra.mxu0 0.0
      %886 = vmatpush.msra.mxu0 0.0
      %887 = vmatpush.msra.mxu0 0.0
      %888 = vmatpush.msra.mxu0 0.0
      %889 = vmatpush.msra.mxu0 0.0
      %890 = vmatpush.msra.mxu0 0.0
      %891 = vmatpush.msra.mxu0 0.0
      %892 = vmatpush.msra.mxu0 0.0
      %893 = vmatpush.msra.mxu0 0.0
      %894 = vmatpush.msra.mxu0 0.0
      %895 = vmatpush.msra.mxu0 0.0
      %v896 = vand.u32 %v454, 4294901760
      %v897 = vsub.f32 %v454, %v896
      %v898 = vand.u32 %v897, 4294901760
      %v899 = vsub.f32 %v897, %v898
      %v900 = vand.u32 %v899, 4294901760
      %901 = vmatpush.msra.mxu0 %v900
      %v902 = vand.u32 %v452, 4294901760
      %v903 = vsub.f32 %v452, %v902
      %v904 = vand.u32 %v903, 4294901760
      %v905 = vsub.f32 %v903, %v904
      %v906 = vand.u32 %v905, 4294901760
      %907 = vmatpush.msra.mxu0 %v906
      %v908 = vand.u32 %v450, 4294901760
      %v909 = vsub.f32 %v450, %v908
      %v910 = vand.u32 %v909, 4294901760
      %v911 = vsub.f32 %v909, %v910
      %v912 = vand.u32 %v911, 4294901760
      %913 = vmatpush.msra.mxu0 %v912
      %v914 = vand.u32 %v448, 4294901760
      %v915 = vsub.f32 %v448, %v914
      %v916 = vand.u32 %v915, 4294901760
      %v917 = vsub.f32 %v915, %v916
      %v918 = vand.u32 %v917, 4294901760
      %919 = vmatpush.msra.mxu0 %v918
      %v920 = vand.u32 %v853, 4294901760
      %921 = vmatmul.f32.gmra.mxu0 %v920
      %v922 = vpop.f32.mrf.mxu0
      %v923 = vadd.f32 %v882, %v922
      %924 = vdwg.mxu0
      %925 = vmatpush.msra.mxu0 0.0
      %926 = vmatpush.msra.mxu0 0.0
      %927 = vmatpush.msra.mxu0 0.0
      %928 = vmatpush.msra.mxu0 0.0
      %929 = vmatpush.msra.mxu0 0.0
      %930 = vmatpush.msra.mxu0 0.0
      %931 = vmatpush.msra.mxu0 0.0
      %932 = vmatpush.msra.mxu0 0.0
      %933 = vmatpush.msra.mxu0 0.0
      %934 = vmatpush.msra.mxu0 0.0
      %935 = vmatpush.msra.mxu0 0.0
      %936 = vmatpush.msra.mxu0 0.0
      %v937 = vand.u32 %v454, 4294901760
      %v938 = vsub.f32 %v454, %v937
      %939 = vmatpush.msra.mxu0 %v938
      %v940 = vand.u32 %v452, 4294901760
      %v941 = vsub.f32 %v452, %v940
      %942 = vmatpush.msra.mxu0 %v941
      %v943 = vand.u32 %v450, 4294901760
      %v944 = vsub.f32 %v450, %v943
      %945 = vmatpush.msra.mxu0 %v944
      %v946 = vand.u32 %v448, 4294901760
      %v947 = vsub.f32 %v448, %v946
      %948 = vmatpush.msra.mxu0 %v947
      %v949 = vand.u32 %v853, 4294901760
      %v950 = vsub.f32 %v853, %v949
      %951 = vmatmul.f32.gmra.mxu0 %v950
      %v952 = vpop.f32.mrf.mxu0
      %v953 = vadd.f32 %v923, %v952
      %954 = vdwg.mxu0
      %955 = vmatpush.msra.mxu0 0.0
      %956 = vmatpush.msra.mxu0 0.0
      %957 = vmatpush.msra.mxu0 0.0
      %958 = vmatpush.msra.mxu0 0.0
      %959 = vmatpush.msra.mxu0 0.0
      %960 = vmatpush.msra.mxu0 0.0
      %961 = vmatpush.msra.mxu0 0.0
      %962 = vmatpush.msra.mxu0 0.0
      %963 = vmatpush.msra.mxu0 0.0
      %964 = vmatpush.msra.mxu0 0.0
      %965 = vmatpush.msra.mxu0 0.0
      %966 = vmatpush.msra.mxu0 0.0
      %v967 = vand.u32 %v454, 4294901760
      %968 = vmatpush.msra.mxu0 %v967
      %v969 = vand.u32 %v452, 4294901760
      %970 = vmatpush.msra.mxu0 %v969
      %v971 = vand.u32 %v450, 4294901760
      %972 = vmatpush.msra.mxu0 %v971
      %v973 = vand.u32 %v448, 4294901760
      %974 = vmatpush.msra.mxu0 %v973
      %v975 = vand.u32 %v853, 4294901760
      %v976 = vsub.f32 %v853, %v975
      %v977 = vand.u32 %v976, 4294901760
      %978 = vmatmul.f32.gmra.mxu0 %v977
      %v979 = vpop.f32.mrf.mxu0
      %v980 = vadd.f32 %v953, %v979
      %981 = vdwg.mxu0
      %982 = vmatpush.msra.mxu0 0.0
      %983 = vmatpush.msra.mxu0 0.0
      %984 = vmatpush.msra.mxu0 0.0
      %985 = vmatpush.msra.mxu0 0.0
      %986 = vmatpush.msra.mxu0 0.0
      %987 = vmatpush.msra.mxu0 0.0
      %988 = vmatpush.msra.mxu0 0.0
      %989 = vmatpush.msra.mxu0 0.0
      %990 = vmatpush.msra.mxu0 0.0
      %991 = vmatpush.msra.mxu0 0.0
      %992 = vmatpush.msra.mxu0 0.0
      %993 = vmatpush.msra.mxu0 0.0
      %v994 = vand.u32 %v454, 4294901760
      %v995 = vsub.f32 %v454, %v994
      %v996 = vand.u32 %v995, 4294901760
      %997 = vmatpush.msra.mxu0 %v996
      %v998 = vand.u32 %v452, 4294901760
      %v999 = vsub.f32 %v452, %v998
      %v1000 = vand.u32 %v999, 4294901760
      %1001 = vmatpush.msra.mxu0 %v1000
      %v1002 = vand.u32 %v450, 4294901760
      %v1003 = vsub.f32 %v450, %v1002
      %v1004 = vand.u32 %v1003, 4294901760
      %1005 = vmatpush.msra.mxu0 %v1004
      %v1006 = vand.u32 %v448, 4294901760
      %v1007 = vsub.f32 %v448, %v1006
      %v1008 = vand.u32 %v1007, 4294901760
      %1009 = vmatpush.msra.mxu0 %v1008
      %v1010 = vand.u32 %v853, 4294901760
      %1011 = vmatmul.f32.gmra.mxu0 %v1010
      %v1012 = vpop.f32.mrf.mxu0
      %v1013 = vadd.f32 %v980, %v1012
      %1014 = vdwg.mxu0
      %1015 = vmatpush.msra.mxu0 0.0
      %1016 = vmatpush.msra.mxu0 0.0
      %1017 = vmatpush.msra.mxu0 0.0
      %1018 = vmatpush.msra.mxu0 0.0
      %1019 = vmatpush.msra.mxu0 0.0
      %1020 = vmatpush.msra.mxu0 0.0
      %1021 = vmatpush.msra.mxu0 0.0
      %1022 = vmatpush.msra.mxu0 0.0
      %1023 = vmatpush.msra.mxu0 0.0
      %1024 = vmatpush.msra.mxu0 0.0
      %1025 = vmatpush.msra.mxu0 0.0
      %1026 = vmatpush.msra.mxu0 0.0
      %v1027 = vand.u32 %v454, 4294901760
      %1028 = vmatpush.msra.mxu0 %v1027
      %v1029 = vand.u32 %v452, 4294901760
      %1030 = vmatpush.msra.mxu0 %v1029
      %v1031 = vand.u32 %v450, 4294901760
      %1032 = vmatpush.msra.mxu0 %v1031
      %v1033 = vand.u32 %v448, 4294901760
      %1034 = vmatpush.msra.mxu0 %v1033
      %v1035 = vand.u32 %v853, 4294901760
      %1036 = vmatmul.f32.gmra.mxu0 %v1035
      %v1037 = vpop.f32.mrf.mxu0
      %v1038 = vadd.f32 %v1013, %v1037
      %1039 = vdwg.mxu0
      %1040 = vmatpush.msra.mxu0 0.0
      %1041 = vmatpush.msra.mxu0 0.0
      %1042 = vmatpush.msra.mxu0 0.0
      %1043 = vmatpush.msra.mxu0 0.0
      %1044 = vmatpush.msra.mxu0 0.0
      %1045 = vmatpush.msra.mxu0 0.0
      %1046 = vmatpush.msra.mxu0 0.0
      %1047 = vmatpush.msra.mxu0 0.0
      %1048 = vmatpush.msra.mxu0 0.0
      %1049 = vmatpush.msra.mxu0 0.0
      %1050 = vmatpush.msra.mxu0 0.0
      %1051 = vmatpush.msra.mxu0 0.0
      %v1052 = vand.u32 %v455, 4294901760
      %1053 = vmatpush.msra.mxu0 %v1052
      %v1054 = vand.u32 %v453, 4294901760
      %1055 = vmatpush.msra.mxu0 %v1054
      %v1056 = vand.u32 %v451, 4294901760
      %1057 = vmatpush.msra.mxu0 %v1056
      %v1058 = vand.u32 %v449, 4294901760
      %1059 = vmatpush.msra.mxu0 %v1058
      %v1060 = vand.u32 %v853, 4294901760
      %v1061 = vsub.f32 %v853, %v1060
      %v1062 = vand.u32 %v1061, 4294901760
      %v1063 = vsub.f32 %v1061, %v1062
      %v1064 = vand.u32 %v1063, 4294901760
      %1065 = vmatmul.f32.gmra.mxu0 %v1064
      %v1066 = vpop.f32.mrf.mxu0
      %v1067 = vadd.f32 %v850, %v1066
      %1068 = vdwg.mxu0
      %1069 = vmatpush.msra.mxu0 0.0
      %1070 = vmatpush.msra.mxu0 0.0
      %1071 = vmatpush.msra.mxu0 0.0
      %1072 = vmatpush.msra.mxu0 0.0
      %1073 = vmatpush.msra.mxu0 0.0
      %1074 = vmatpush.msra.mxu0 0.0
      %1075 = vmatpush.msra.mxu0 0.0
      %1076 = vmatpush.msra.mxu0 0.0
      %1077 = vmatpush.msra.mxu0 0.0
      %1078 = vmatpush.msra.mxu0 0.0
      %1079 = vmatpush.msra.mxu0 0.0
      %1080 = vmatpush.msra.mxu0 0.0
      %v1081 = vand.u32 %v455, 4294901760
      %v1082 = vsub.f32 %v455, %v1081
      %v1083 = vand.u32 %v1082, 4294901760
      %v1084 = vsub.f32 %v1082, %v1083
      %v1085 = vand.u32 %v1084, 4294901760
      %1086 = vmatpush.msra.mxu0 %v1085
      %v1087 = vand.u32 %v453, 4294901760
      %v1088 = vsub.f32 %v453, %v1087
      %v1089 = vand.u32 %v1088, 4294901760
      %v1090 = vsub.f32 %v1088, %v1089
      %v1091 = vand.u32 %v1090, 4294901760
      %1092 = vmatpush.msra.mxu0 %v1091
      %v1093 = vand.u32 %v451, 4294901760
      %v1094 = vsub.f32 %v451, %v1093
      %v1095 = vand.u32 %v1094, 4294901760
      %v1096 = vsub.f32 %v1094, %v1095
      %v1097 = vand.u32 %v1096, 4294901760
      %1098 = vmatpush.msra.mxu0 %v1097
      %v1099 = vand.u32 %v449, 4294901760
      %v1100 = vsub.f32 %v449, %v1099
      %v1101 = vand.u32 %v1100, 4294901760
      %v1102 = vsub.f32 %v1100, %v1101
      %v1103 = vand.u32 %v1102, 4294901760
      %1104 = vmatpush.msra.mxu0 %v1103
      %v1105 = vand.u32 %v853, 4294901760
      %1106 = vmatmul.f32.gmra.mxu0 %v1105
      %v1107 = vpop.f32.mrf.mxu0
      %v1108 = vadd.f32 %v1067, %v1107
      %1109 = vdwg.mxu0
      %1110 = vmatpush.msra.mxu0 0.0
      %1111 = vmatpush.msra.mxu0 0.0
      %1112 = vmatpush.msra.mxu0 0.0
      %1113 = vmatpush.msra.mxu0 0.0
      %1114 = vmatpush.msra.mxu0 0.0
      %1115 = vmatpush.msra.mxu0 0.0
      %1116 = vmatpush.msra.mxu0 0.0
      %1117 = vmatpush.msra.mxu0 0.0
      %1118 = vmatpush.msra.mxu0 0.0
      %1119 = vmatpush.msra.mxu0 0.0
      %1120 = vmatpush.msra.mxu0 0.0
      %1121 = vmatpush.msra.mxu0 0.0
      %v1122 = vand.u32 %v455, 4294901760
      %v1123 = vsub.f32 %v455, %v1122
      %1124 = vmatpush.msra.mxu0 %v1123
      %v1125 = vand.u32 %v453, 4294901760
      %v1126 = vsub.f32 %v453, %v1125
      %1127 = vmatpush.msra.mxu0 %v1126
      %v1128 = vand.u32 %v451, 4294901760
      %v1129 = vsub.f32 %v451, %v1128
      %1130 = vmatpush.msra.mxu0 %v1129
      %v1131 = vand.u32 %v449, 4294901760
      %v1132 = vsub.f32 %v449, %v1131
      %1133 = vmatpush.msra.mxu0 %v1132
      %v1134 = vand.u32 %v853, 4294901760
      %v1135 = vsub.f32 %v853, %v1134
      %1136 = vmatmul.f32.gmra.mxu0 %v1135
      %v1137 = vpop.f32.mrf.mxu0
      %v1138 = vadd.f32 %v1108, %v1137
      %1139 = vdwg.mxu0
      %1140 = vmatpush.msra.mxu0 0.0
      %1141 = vmatpush.msra.mxu0 0.0
      %1142 = vmatpush.msra.mxu0 0.0
      %1143 = vmatpush.msra.mxu0 0.0
      %1144 = vmatpush.msra.mxu0 0.0
      %1145 = vmatpush.msra.mxu0 0.0
      %1146 = vmatpush.msra.mxu0 0.0
      %1147 = vmatpush.msra.mxu0 0.0
      %1148 = vmatpush.msra.mxu0 0.0
      %1149 = vmatpush.msra.mxu0 0.0
      %1150 = vmatpush.msra.mxu0 0.0
      %1151 = vmatpush.msra.mxu0 0.0
      %v1152 = vand.u32 %v455, 4294901760
      %1153 = vmatpush.msra.mxu0 %v1152
      %v1154 = vand.u32 %v453, 4294901760
      %1155 = vmatpush.msra.mxu0 %v1154
      %v1156 = vand.u32 %v451, 4294901760
      %1157 = vmatpush.msra.mxu0 %v1156
      %v1158 = vand.u32 %v449, 4294901760
      %1159 = vmatpush.msra.mxu0 %v1158
      %v1160 = vand.u32 %v853, 4294901760
      %v1161 = vsub.f32 %v853, %v1160
      %v1162 = vand.u32 %v1161, 4294901760
      %1163 = vmatmul.f32.gmra.mxu0 %v1162
      %v1164 = vpop.f32.mrf.mxu0
      %v1165 = vadd.f32 %v1138, %v1164
      %1166 = vdwg.mxu0
      %1167 = vmatpush.msra.mxu0 0.0
      %1168 = vmatpush.msra.mxu0 0.0
      %1169 = vmatpush.msra.mxu0 0.0
      %1170 = vmatpush.msra.mxu0 0.0
      %1171 = vmatpush.msra.mxu0 0.0
      %1172 = vmatpush.msra.mxu0 0.0
      %1173 = vmatpush.msra.mxu0 0.0
      %1174 = vmatpush.msra.mxu0 0.0
      %1175 = vmatpush.msra.mxu0 0.0
      %1176 = vmatpush.msra.mxu0 0.0
      %1177 = vmatpush.msra.mxu0 0.0
      %1178 = vmatpush.msra.mxu0 0.0
      %v1179 = vand.u32 %v455, 4294901760
      %v1180 = vsub.f32 %v455, %v1179
      %v1181 = vand.u32 %v1180, 4294901760
      %1182 = vmatpush.msra.mxu0 %v1181
      %v1183 = vand.u32 %v453, 4294901760
      %v1184 = vsub.f32 %v453, %v1183
      %v1185 = vand.u32 %v1184, 4294901760
      %1186 = vmatpush.msra.mxu0 %v1185
      %v1187 = vand.u32 %v451, 4294901760
      %v1188 = vsub.f32 %v451, %v1187
      %v1189 = vand.u32 %v1188, 4294901760
      %1190 = vmatpush.msra.mxu0 %v1189
      %v1191 = vand.u32 %v449, 4294901760
      %v1192 = vsub.f32 %v449, %v1191
      %v1193 = vand.u32 %v1192, 4294901760
      %1194 = vmatpush.msra.mxu0 %v1193
      %v1195 = vand.u32 %v853, 4294901760
      %1196 = vmatmul.f32.gmra.mxu0 %v1195
      %v1197 = vpop.f32.mrf.mxu0
      %v1198 = vadd.f32 %v1165, %v1197
      %1199 = vdwg.mxu0
      %1200 = vmatpush.msra.mxu0 0.0
      %1201 = vmatpush.msra.mxu0 0.0
      %1202 = vmatpush.msra.mxu0 0.0
      %1203 = vmatpush.msra.mxu0 0.0
      %1204 = vmatpush.msra.mxu0 0.0
      %1205 = vmatpush.msra.mxu0 0.0
      %1206 = vmatpush.msra.mxu0 0.0
      %1207 = vmatpush.msra.mxu0 0.0
      %1208 = vmatpush.msra.mxu0 0.0
      %1209 = vmatpush.msra.mxu0 0.0
      %1210 = vmatpush.msra.mxu0 0.0
      %1211 = vmatpush.msra.mxu0 0.0
      %v1212 = vand.u32 %v455, 4294901760
      %1213 = vmatpush.msra.mxu0 %v1212
      %v1214 = vand.u32 %v453, 4294901760
      %1215 = vmatpush.msra.mxu0 %v1214
      %v1216 = vand.u32 %v451, 4294901760
      %1217 = vmatpush.msra.mxu0 %v1216
      %v1218 = vand.u32 %v449, 4294901760
      %1219 = vmatpush.msra.mxu0 %v1218
      %v1220 = vand.u32 %v853, 4294901760
      %1221 = vmatmul.f32.gmra.mxu0 %v1220
      %v1222 = vpop.f32.mrf.mxu0
      %v1223 = vadd.f32 %v1198, %v1222
      %1224 = vdwg.mxu0
      %v1227 = vrot.slane %v1223, 4
      %v1228 = vsel %vm841, %v1038, %v1227
      %v1230 = vadd.f32 %v844, %v1228
      %1231 = vst [vmem:[%s376] sm:$0xff] %v1230
      %s1232 = smul.u32 2, %s24
      %p1233 = scmp.lt.s32.totalorder %s23, 1
      %s1234 = scalar_select %p1233, %s23, 1
      %p1235 = scmp.lt.s32.totalorder %s1232, 1
      %s1236 = scalar_select %p1235, %s1232, 1
      %s1237 = smul.addr %s1234, 2
      %s1238 = sadd.s32 %s1236, %s1237
      %s1239 = smul.addr %s1238, 4
      %s1240 = scalar_lea.vmem %s8, %s1239
      // Predicated region
      $region53: #{spade_norm_forward.1} parent=51 // pred_check
        %p1241 = pneg %p233
      $region54: #{spade_norm_forward.1} parent=51 // pred_check_branch
        %1243 = sbr.rel (%p1241) target = $region56
      $region55: #{spade_norm_forward.1} parent=51 // pred_region
        %s1244 = smul.u32 2, %s24
      $region56: #{spade_norm_forward.1} parent=51 // pred_fallthru
        _
    $region52: #{spade_norm_forward.1} parent=5 // pred_fallthru
      _
    %p1245 = scmp.le.s32.totalorder 2, %s14
    // Predicated region
    $region57: #{spade_norm_forward.1} parent=5 // pred_check
      %p1246 = pneg %p1245
    $region58: #{spade_norm_forward.1} parent=5 // pred_check_branch
      %1248 = sbr.rel (%p1246) target = $region60
    $region59: #{spade_norm_forward.1} parent=5 // pred_region
      %s1249 = ssub.s32 %s14, 2
      // Predicated region
      $region61: #{spade_norm_forward.1} parent=59 // pred_check
        %p1250 = pneg %p239
      $region62: #{spade_norm_forward.1} parent=59 // pred_check_branch
        %1252 = sbr.rel (%p1250) target = $region64
      $region63: #{spade_norm_forward.1} parent=59 // pred_region
        %s1253 = smul.u32 2, %s26
        %p1254 = scmp.lt.s32.totalorder %s25, 1
        %s1255 = scalar_select %p1254, %s25, 1
        %p1256 = scmp.lt.s32.totalorder %s1253, 1
        %s1257 = scalar_select %p1256, %s1253, 1
        %s1258 = smul.addr %s1255, 2
        %s1259 = sadd.s32 %s1257, %s1258
        %s1260 = smul.addr %s1259, 4
        %s1261 = scalar_lea.vmem %s8, %s1260
      $region64: #{spade_norm_forward.1} parent=59 // pred_fallthru
        _
    $region60: #{spade_norm_forward.1} parent=5 // pred_fallthru
      _
  $region6: #{spade_norm_forward.1} parent=0 // loop_footer
    %s18 = sadd.s32 1, %s14
  $region7: #{spade_norm_forward.1} parent=0 // loop_footer_branch
    %13 = sbr.rel target = $region3
  $region8: #{spade_norm_forward.1} parent=0 // loop_exit
    _

</llo_original>
